<compile_context>
chip_gen: v7x
topology: tpu7x:2x2x1
jax: 0.10.0
libtpu: 0.0.40
codegen_flags: <defaults>
</compile_context>

<pallas_src>
import math

import jax
import jax.numpy as jnp
from jax.experimental import pallas as pl
from jax.experimental.pallas import tpu as pltpu


_LANE = 128
_PACK = 16                                   # row multiple friendly to f32 (8) and bf16 (16) vregs
_WEIGHT_RESIDENT_BUDGET = 8 * 1024 * 1024    # above this, stream weight column blocks


def _round_up(x, m):
    return ((x + m - 1) // m) * m


def _vmem_limit_bytes():
    # Derive the scoped-VMEM limit from hardware (64 MiB on v5e/v6e's 128 MiB
    # VMEM, 32 MiB on v7x's 64 MiB). The try/except only guards the hardware
    # info query (conservative fallback); it never wraps a pallas_call.
    try:
        cap = int(pltpu.get_tpu_info().vmem_capacity_bytes)
    except Exception:
        cap = 64 << 20
    return max(32 << 20, min(96 << 20, cap // 2))


def _pooler_kernel(x_ref, w_ref, b_ref, o_ref):
    # x_ref: [tile_m, H_in] (source dtype), w_ref: [H_in, tile_n] (MXU dtype),
    # b_ref: [1, tile_n] (f32), o_ref: [tile_m, tile_n].
    # Cast activations to the MXU dtype inside the kernel (free on the VPU,
    # avoids an extra HBM pass in the wrapper); f32 accumulate; bias + tanh in
    # f32 on the VPU/EUP path, cast on store.
    x = x_ref[...].astype(w_ref.dtype)
    y = jnp.dot(x, w_ref[...], preferred_element_type=jnp.float32)
    o_ref[...] = jnp.tanh(y + b_ref[...]).astype(o_ref.dtype)


def prepare_pooler_params(weight, bias, *, mxu_dtype=jnp.bfloat16):
    """One-time parameter prep — hoist out of the per-call path (model load).

    weight: [H_out, H_in] (PyTorch nn.Linear layout), bias: [H_out].
    Returns (w_t [H_in, H_out] in `mxu_dtype`, bias2d [1, H_out] f32).
    Pass mxu_dtype=jnp.float32 for exact-fp32 parity with PyTorch eval numerics.
    """
    H_out, H_in = weight.shape
    w_t = jnp.asarray(weight).T.astype(mxu_dtype)
    b2d = jnp.asarray(bias).astype(jnp.float32).reshape(1, H_out)
    return w_t, b2d


def _select_tiles(M, H_in, H_out, x_bytes, out_bytes, w_bytes, vmem_limit,
                  tile_m, tile_n):
    lane_aligned = (H_out % _LANE == 0)

    # Weight column (N) tiling: only when H_out is lane aligned and the
    # resident weight would blow the per-chip budget (v7x: 64 MiB VMEM).
    if tile_n is None:
        if lane_aligned and H_in * H_out * w_bytes > _WEIGHT_RESIDENT_BUDGET:
            cols = max(_LANE,
                       (_WEIGHT_RESIDENT_BUDGET // (H_in * w_bytes)) // _LANE * _LANE)
            tile_n = min(H_out, cols)
        else:
            tile_n = H_out   # resident weight (or full-dim block for toy sizes)

    # tile_m from a VMEM budget, accounting for every live buffer:
    budget = (vmem_limit * 3) // 4
    fixed = 2 * H_in * tile_n * w_bytes + 2 * tile_n * 4        # weight (dbl-buf) + f32 bias
    per_row = (2 * H_in * x_bytes            # double-buffered activation tile (source dtype)
               + H_in * w_bytes              # in-kernel cast copy of the tile
               + tile_n * 4                  # f32 matmul/bias/tanh intermediate
               + 2 * tile_n * out_bytes)     # double-buffered output tile
    cap = max(_PACK, ((budget - fixed) // per_row) // _PACK * _PACK)
    max_tile = 2048 if vmem_limit >= (64 << 20) else 1024        # bigger tiles on 128 MiB parts

    if tile_m is None:
        tile_m = min(max_tile, cap, _round_up(M, _PACK))
        if M >= 2 * _PACK:
            # Guarantee >= 2 row-blocks so the "parallel" axis can split across
            # both v7x TensorCores (one extra ~0.35us step elsewhere: harmless).
            tile_m = min(tile_m, _round_up(pl.cdiv(M, 2), _PACK))
        if tile_m > 128 and tile_m % 256:
            cand = _round_up(tile_m, 256)    # MXU-native row multiple for mid-size M
            if cand <= min(max_tile, cap):
                tile_m = cand
    else:
        tile_m = _round_up(tile_m, _PACK)
    return tile_m, tile_n


def roberta_pooler_apply(hidden_states, w_t, b2d, *, out_dtype=None,
                         tile_m=None, tile_n=None):
    """tanh(hidden_states @ w_t + b) with pre-prepared parameters.

    hidden_states: [..., H_in] (any leading shape; passed in its ORIGINAL dtype,
    cast happens inside the kernel). Returns [..., H_out] in `out_dtype`
    (default: hidden_states.dtype; pass bf16 to halve store traffic on v5e).
    """
    # TODO(synk): training-mode dropout (Bernoulli masking with pltpu.prng_*) not
    # implemented; forward matches eval()/inference semantics (dropout == identity).
    H_in, H_out = w_t.shape
    assert hidden_states.shape[-1] == H_in
    lead = hidden_states.shape[:-1]
    M = int(math.prod(lead)) if lead else 1
    if out_dtype is None:
        out_dtype = hidden_states.dtype

    x = hidden_states.reshape(M, H_in)                 # metadata-only reshape, no copy
    x_bytes = jnp.dtype(x.dtype).itemsize
    w_bytes = jnp.dtype(w_t.dtype).itemsize
    out_bytes = jnp.dtype(out_dtype).itemsize
    vmem_limit = _vmem_limit_bytes()

    tile_m, tile_n = _select_tiles(M, H_in, H_out, x_bytes, out_bytes, w_bytes,
                                   vmem_limit, tile_m, tile_n)
    grid = (pl.cdiv(M, tile_m), pl.cdiv(H_out, tile_n))   # ragged blocks masked by Pallas

    cost = pl.CostEstimate(
        flops=2 * M * H_in * H_out,
        transcendentals=M * H_out,
        bytes_accessed=(M * H_in * x_bytes           # activations in
                        + H_in * H_out * w_bytes     # weight
                        + H_out * 4                  # bias
                        + M * H_out * out_bytes),    # output
    )

    out = pl.pallas_call(
        _pooler_kernel,
        out_shape=jax.ShapeDtypeStruct((M, H_out), out_dtype),
        grid=grid,
        in_specs=[
            # activations: resident across the (inner) N axis
            pl.BlockSpec((tile_m, H_in), lambda i, j: (i, 0)),
            # weight column block (usually the whole weight, constant index_map)
            pl.BlockSpec((H_in, tile_n), lambda i, j: (0, j)),
            # bias column block
            pl.BlockSpec((1, tile_n), lambda i, j: (0, j)),
        ],
        out_specs=pl.BlockSpec((tile_m, tile_n), lambda i, j: (i, j)),
        compiler_params=pltpu.CompilerParams(
            dimension_semantics=("parallel", "parallel"),
            vmem_limit_bytes=vmem_limit,
        ),
        cost_estimate=cost,
    )(x, w_t, b2d)

    return out.reshape(*lead, H_out)


def roberta_pooler(hidden_states, weight, bias, *, mxu_dtype=jnp.bfloat16,
                   out_dtype=None, tile_m=None, tile_n=None):
    """Convenience wrapper. For repeated calls, hoist prepare_pooler_params()."""
    w_t, b2d = prepare_pooler_params(weight, bias, mxu_dtype=mxu_dtype)
    return roberta_pooler_apply(hidden_states, w_t, b2d, out_dtype=out_dtype,
                                tile_m=tile_m, tile_n=tile_n)


if __name__ == "__main__":
    # Small shapes consistent with the module: batch=2, seq=8, hidden=32.
    B, S, H = 2, 8, 32

    key = jax.random.PRNGKey(0)
    k_x, k_w, k_b = jax.random.split(key, 3)

    hidden_states = jax.random.normal(k_x, (B, S, H), dtype=jnp.float32)
    # nn.Linear(H, H): weight [H_out, H_in], bias [H_out].
    weight = jax.random.normal(k_w, (H, H), dtype=jnp.float32) * 0.02
    bias = jax.random.normal(k_b, (H,), dtype=jnp.float32) * 0.02

    # One-time parameter prep (model-load time), then the per-call apply.
    w_t, b2d = prepare_pooler_params(weight, bias)
    out = roberta_pooler_apply(hidden_states, w_t, b2d)
    out = jax.block_until_ready(out)

    # Reference in plain JAX (eval-mode dropout == identity), mirroring the
    # bf16 MXU inputs / f32 accumulation the kernel uses.
    x2d = hidden_states.reshape(-1, H)
    ref = jnp.tanh(
        jnp.dot(x2d.astype(jnp.bfloat16), weight.T.astype(jnp.bfloat16),
                preferred_element_type=jnp.float32) + bias
    ).astype(hidden_states.dtype).reshape(B, S, H)

    assert out.shape == (B, S, H)
    assert jnp.allclose(out, ref, atol=1e-2, rtol=1e-2), \
        float(jnp.max(jnp.abs(out - ref)))

    print("KERNEL_OK")
</pallas_src>

<mosaic_0001>
module attributes {stable_mosaic.version = 11 : i64} {
  func.func @_pooler_kernel(%arg0: i32, %arg1: i32, %arg2: memref<16x32xf32, #tpu.memory_space<vmem>>, %arg3: memref<32x32xbf16, #tpu.memory_space<vmem>>, %arg4: memref<1x32xf32, #tpu.memory_space<vmem>>, %arg5: memref<16x32xf32, #tpu.memory_space<vmem>>) attributes {dimension_semantics = [#tpu.dimension_semantics<parallel>, #tpu.dimension_semantics<parallel>], iteration_bounds = array<i64: 1, 1>, scalar_prefetch = 0 : i64, scratch_operands = 0 : i64, tpu.core_type = #tpu.core_type<tc>, window_params = [{transform_indices = @transform_0, window_bounds = array<i64: 16, 32>}, {transform_indices = @transform_1, window_bounds = array<i64: 32, 32>}, {transform_indices = @transform_2, window_bounds = array<i64: 1, 32>}, {transform_indices = @transform_3, window_bounds = array<i64: 16, 32>}]} {
    %c0 = arith.constant 0 : index
    %c0_0 = arith.constant 0 : index
    %0 = vector.load %arg2[%c0, %c0_0] : memref<16x32xf32, #tpu.memory_space<vmem>>, vector<16x32xf32>
    %1 = arith.truncf %0 : vector<16x32xf32> to vector<16x32xbf16>
    %c0_1 = arith.constant 0 : index
    %c0_2 = arith.constant 0 : index
    %2 = vector.load %arg3[%c0_1, %c0_2] : memref<32x32xbf16, #tpu.memory_space<vmem>>, vector<32x32xbf16>
    %cst = arith.constant dense<0.000000e+00> : vector<16x32xf32>
    %3 = tpu.matmul %1, %2, %cst {dimension_numbers = #tpu.dot_dimension_numbers<[1], [0], [0], [1], [0, 0, 1, 1], [], []>} : vector<16x32xbf16>, vector<32x32xbf16>, vector<16x32xf32> -> vector<16x32xf32>
    %c0_3 = arith.constant 0 : index
    %c0_4 = arith.constant 0 : index
    %4 = vector.load %arg4[%c0_3, %c0_4] : memref<1x32xf32, #tpu.memory_space<vmem>>, vector<1x32xf32>
    %5 = vector.broadcast %4 : vector<1x32xf32> to vector<16x32xf32>
    %6 = arith.addf %3, %5 : vector<16x32xf32>
    %7 = math.tanh %6 : vector<16x32xf32>
    %c0_5 = arith.constant 0 : index
    %c0_6 = arith.constant 0 : index
    %8 = vector.load %arg5[%c0_5, %c0_6] : memref<16x32xf32, #tpu.memory_space<vmem>>, vector<16x32xf32>
    tpu.vector_store %arg5[%c0_5, %c0_6], %7 {strides = array<i32>} : memref<16x32xf32, #tpu.memory_space<vmem>>, vector<16x32xf32>,
    return
  }
  func.func @transform_0(%arg0: i32, %arg1: i32) -> (i32, i32) {
    %c0_i32 = arith.constant 0 : i32
    %c0_i32_0 = arith.constant 0 : i32
    return %arg0, %c0_i32 : i32, i32
  }
  func.func @transform_1(%arg0: i32, %arg1: i32) -> (i32, i32) {
    %c0_i32 = arith.constant 0 : i32
    %c0_i32_0 = arith.constant 0 : i32
    return %c0_i32, %arg1 : i32, i32
  }
  func.func @transform_2(%arg0: i32, %arg1: i32) -> (i32, i32) {
    %c0_i32 = arith.constant 0 : i32
    %c0_i32_0 = arith.constant 0 : i32
    return %c0_i32, %arg1 : i32, i32
  }
  func.func @transform_3(%arg0: i32, %arg1: i32) -> (i32, i32) {
    %c0_i32 = arith.constant 0 : i32
    return %arg0, %arg1 : i32, i32
  }
}

</mosaic_0001>

<llo_original>
// kernel: tpu_custom_call.1
$region0: #{tpu_custom_call.1}
  #allocation0 [shape = 'u32[]', space=smem, size = 0x4, offset = 0x4, fixed_abs, tag = 'smem constant byte address 0x4 - core index']
  #allocation1 [shape = 'u32[144,128]{1,0:T(1,128)}', space=vmem, size = 0x12000, scoped, tag = 'internal scratch']
  %s0 = inlined_call_operand.hbm [shape: f32[16,32], index: 0, kind: input, shape index: {}]
  %s1 = inlined_call_operand.hbm [shape: bf16[32,32], index: 1, kind: input, shape index: {}]
  %s2 = inlined_call_operand.vmem [shape: f32[1,32], index: 2, kind: input, shape index: {}]
  %s3 = inlined_call_operand.hbm [shape: f32[16,32], index: 3, kind: output, shape index: {}]
  %s4 = sld [smem:[#allocation0]]
  $region30: #{tpu_custom_call.1} parent=0
    _
  %s6 = ssub.s32 1, %s4
  %s7 = scalar_select 0, %s6, %s4
  $region1: #{tpu_custom_call.1} parent=0
    #allocation2 [shape = 'u8[8192]{0}', space=vmem, size = 0x2000, scoped, tag = 'input window, operand 0, single buffered']
    #allocation3 [shape = 's32[1]{0}', space=sflag, size = 0x4, scoped, tag = 'scoped memory for tpu_custom_call.1']
    #allocation4 [shape = 's32[1]{0}', space=sflag, size = 0x4, scoped, tag = 'scoped memory for tpu_custom_call.1']
    #allocation5 [shape = 'u8[8192]{0}', space=vmem, size = 0x2000, scoped, tag = 'input window, operand 1, single buffered']
    #allocation6 [shape = 's32[1]{0}', space=sflag, size = 0x4, scoped, tag = 'scoped memory for tpu_custom_call.1']
    #allocation7 [shape = 'u8[8192]{0}', space=vmem, size = 0x2000, scoped, tag = 'output window, operand 0, single buffered']
    %8 = vsyncpa [#allocation3], 0
    %9 = vsyncpa [#allocation6], 0
    %10 = vsyncpa [#allocation4], 0
    // Predicated region
    $region2: #{tpu_custom_call.1} parent=1 // pred_check
      _
    $region3: #{tpu_custom_call.1} parent=1 // pred_check_branch
      %12 = sbr.rel (0) target = $region5
    $region4: #{tpu_custom_call.1} parent=1 // pred_region
      %s14 = ssub.s32 256, 256
      %15 = vsyncadd [#allocation3], %s14
      %s16 = sshll.u32 [#allocation2], 4
      %s17 = int_to_ptr.vmem [resolvable:$true] %s16
      %22 = dma.hbm_to_vmem [thread:$0]  %s0, 256, %s17, [#allocation3], 128, 128, 8
    $region5: #{tpu_custom_call.1} parent=1 // pred_fallthru
      _
    // Predicated region
    $region6: #{tpu_custom_call.1} parent=1 // pred_check
      _
    $region7: #{tpu_custom_call.1} parent=1 // pred_check_branch
      %24 = sbr.rel (0) target = $region9
    $region8: #{tpu_custom_call.1} parent=1 // pred_region
      %s26 = ssub.s32 256, 256
      %27 = vsyncadd [#allocation6], %s26
      %s28 = sshll.u32 [#allocation5], 4
      %s29 = int_to_ptr.vmem [resolvable:$true] %s28
      %34 = dma.hbm_to_vmem [thread:$0]  %s1, 256, %s29, [#allocation6], 64, 64, 4
    $region9: #{tpu_custom_call.1} parent=1 // pred_fallthru
      _
    // Predicated region
    $region10: #{tpu_custom_call.1} parent=1 // pred_check
      _
    $region11: #{tpu_custom_call.1} parent=1 // pred_check_branch
      %36 = sbr.rel (0) target = $region13
    $region12: #{tpu_custom_call.1} parent=1 // pred_region
      _
    $region13: #{tpu_custom_call.1} parent=1 // pred_fallthru
      _
    // Predicated region
    $region14: #{tpu_custom_call.1} parent=1 // pred_check
      _
    $region15: #{tpu_custom_call.1} parent=1 // pred_check_branch
      %38 = sbr.rel (0) target = $region17
    $region16: #{tpu_custom_call.1} parent=1 // pred_region
      %39 = dma.done [#allocation3], 256
    $region17: #{tpu_custom_call.1} parent=1 // pred_fallthru
      _
    // Predicated region
    $region18: #{tpu_custom_call.1} parent=1 // pred_check
      _
    $region19: #{tpu_custom_call.1} parent=1 // pred_check_branch
      %41 = sbr.rel (0) target = $region21
    $region20: #{tpu_custom_call.1} parent=1 // pred_region
      %42 = dma.done [#allocation6], 256
    $region21: #{tpu_custom_call.1} parent=1 // pred_fallthru
      _
    %v44 = vld [vmem:[#allocation2] sm:$0xff]
    %v45 = vld [vmem:[#allocation2 + $0x8] sm:$0xff]
    %v46 = vpack.c.bf16 %v45, %v44
    %v47 = vld [vmem:[#allocation5] sm:$0xf]
    %v48 = vld [vmem:[#allocation5 + $0x4] sm:$0xf]
    %v49 = vld [vmem:[#allocation5 + $0x8] sm:$0xf]
    %v50 = vld [vmem:[#allocation5 + $0xc] sm:$0xf]
    %v51 = vld [vmem:[%s2] sm:$0x1]
    %v53 = vlaneseq
    %v54 = vshrl.u32 %v53, 7
    %v55 = vsub.s32 0, %v54
    %v56 = vrot.slane %v51, %v55
    %v62 = vunpack.c.l.b16 %v47
    %v63 = vunpack.c.l.b16 %v48
    %v64 = vunpack.c.l.b16 %v49
    %v65 = vunpack.c.l.b16 %v50
    %v66 = vpack.c.b16 %v63, %v62
    %v67 = vpack.c.b16 %v65, %v64
    %vm70 = vcmask 261120
    %v72 = vsel %vm70, %v46, 0
    %74 = vmatprep.subr.bf16.mxu0 0
    %75 = vmatpush1.bf16.msra.mxu0 %v66
    %76 = vmatprep.subr.bf16.mxu0 0
    %77 = vmatpush1.bf16.msra.mxu0 %v67
    %78 = vmatprep.subr.bf16.mxu0 0
    %79 = vmatpush1.bf16.msra.mxu0 0
    %80 = vmatprep.subr.bf16.mxu0 0
    %81 = vmatpush1.bf16.msra.mxu0 0
    %82 = vmatprep.subr.bf16.mxu0 0
    %83 = vmatpush1.bf16.msra.mxu0 0
    %84 = vmatprep.subr.bf16.mxu0 0
    %85 = vmatpush1.bf16.msra.mxu0 0
    %86 = vmatprep.subr.bf16.mxu0 0
    %87 = vmatpush1.bf16.msra.mxu0 0
    %88 = vmatprep.subr.bf16.mxu0 0
    %89 = vmatpush1.bf16.msra.mxu0 0
    %90 = vmatprep.subr.bf16.mxu0 0
    %91 = vmatpush1.bf16.msra.mxu0 0
    %92 = vmatprep.subr.bf16.mxu0 0
    %93 = vmatpush1.bf16.msra.mxu0 0
    %94 = vmatprep.subr.bf16.mxu0 0
    %95 = vmatpush1.bf16.msra.mxu0 0
    %96 = vmatprep.subr.bf16.mxu0 0
    %97 = vmatpush1.bf16.msra.mxu0 0
    %98 = vmatprep.subr.bf16.mxu0 0
    %99 = vmatpush1.bf16.msra.mxu0 0
    %100 = vmatprep.subr.bf16.mxu0 0
    %101 = vmatpush1.bf16.msra.mxu0 0
    %102 = vmatprep.subr.bf16.mxu0 0
    %103 = vmatpush1.bf16.msra.mxu0 0
    %104 = vmatprep.subr.bf16.mxu0 0
    %105 = vmatpush1.bf16.msra.mxu0 0
    %106 = vmatprep.mubr.bf16.mxu0 0
    %107 = vmatmul.mubr.bf16.gmra.mrb[0].mxu0 %v72
    %v108 = vpop.f32.mrb[0].mxu0
    %v109 = vadd.f32 %v56, %v108
    %v110 = vpop.f32.mrb[0].mxu0
    %v111 = vpop.f32.mrb[0].mxu0
    %v112 = vadd.f32 %v56, %v111
    %v113 = vpop.f32.mrb[0].mxu0
    %114 = vdwg.mxu0
    %v115 = vtanh.pop %v109
    %v116 = vtanh.pop %v112
    %117 = vst.msk [vmem:[#allocation7] sm:$0xff] %vm70, %v115
    %118 = vst.msk [vmem:[#allocation7 + $0x8] sm:$0xff] %vm70, %v116
    // Predicated region
    $region22: #{tpu_custom_call.1} parent=1 // pred_check
      _
    $region23: #{tpu_custom_call.1} parent=1 // pred_check_branch
      %120 = sbr.rel (0) target = $region25
    $region24: #{tpu_custom_call.1} parent=1 // pred_region
      %s122 = ssub.s32 256, 256
      %123 = vsyncadd [#allocation4], %s122
      %s124 = sshll.u32 [#allocation7], 4
      %s125 = int_to_ptr.vmem [resolvable:$true] %s124
      %130 = dma.vmem_to_hbm [thread:$0]  %s125, 256, %s3, [#allocation4], 128, 128, 8
    $region25: #{tpu_custom_call.1} parent=1 // pred_fallthru
      _
    // Predicated region
    $region26: #{tpu_custom_call.1} parent=1 // pred_check
      _
    $region27: #{tpu_custom_call.1} parent=1 // pred_check_branch
      %132 = sbr.rel (0) target = $region29
    $region28: #{tpu_custom_call.1} parent=1 // pred_region
      %133 = dma.done [#allocation4], 256
    $region29: #{tpu_custom_call.1} parent=1 // pred_fallthru
      _
    %134 = vsyncpa [#allocation3], 1
    %135 = vsyncpa [#allocation6], 1
    %136 = vsyncpa [#allocation4], 1

</llo_original>
